<compile_context>
chip_gen: v5e
topology: v5e:2x2
jax: 0.10.0
libtpu: 0.0.40
codegen_flags: <defaults>
</compile_context>

<pallas_src>
import functools

import jax
import jax.numpy as jnp
from jax.experimental import pallas as pl
from jax.experimental.pallas import tpu as pltpu


def _mlp_kernel(*refs, num_layers: int, compute_dtype):
    """Fused MLP for one tile of rows.

    refs = (x_ref, w0_ref, b0_ref, w1_ref, b1_ref, ..., o_ref)
      x_ref : (TM, D0)        VMEM
      wi_ref: (Di, D{i+1})    VMEM (whole weight, resident)
      bi_ref: (1, D{i+1})     VMEM, float32
      o_ref : (TM, D_last)    VMEM
    """
    x_ref = refs[0]
    o_ref = refs[-1]
    wb = refs[1:-1]

    h = x_ref[...]
    for i in range(num_layers):
        w_ref = wb[2 * i]
        b_ref = wb[2 * i + 1]
        if i > 0:
            # activation('relu') + dropout(p=0.0) applied to inputs of layers i>0
            h = jnp.maximum(h, 0.0)
        # Native-dtype MXU operands, f32 accumulate; bias added exactly once.
        acc = jnp.dot(h.astype(compute_dtype), w_ref[...],
                      preferred_element_type=jnp.float32)
        h = acc + b_ref[...]
    o_ref[...] = h.astype(o_ref.dtype)


def _round_up(x: int, m: int) -> int:
    return ((x + m - 1) // m) * m


def _itemsize(dt) -> int:
    return jnp.dtype(dt).itemsize


def linears_forward(x, params, *, tm: int = 512):
    """Equivalent of Linears.forward with activation='relu', dropout_prob=0.0.

    x: [N, D0]; params: list of (w: [D_in, D_out], b: [D_out]) per layer
    (weights stored transposed relative to torch's [out, in]).
    """
    N, d_in = x.shape
    num_layers = len(params)
    assert num_layers >= 1 and params[0][0].shape[0] == d_in
    d_out = params[-1][0].shape[1]
    compute_dtype = params[0][0].dtype

    # Row tile: big enough to keep the MXU busy, but no larger than the
    # 8-row-aligned batch (avoid whole garbage tiles for tiny N).
    tm = max(8, min(tm, _round_up(N, 8)))

    # VMEM budget: resident weights/biases (double-buffered by the pipeline)
    # plus double-buffered x/out tiles plus the widest f32 working activation.
    weight_bytes = sum(2 * (w.size * _itemsize(w.dtype) + w.shape[1] * 4)
                       for (w, _) in params)
    widest = max([d_in] + [w.shape[1] for (w, _) in params])

    def _vmem_needed(rows: int) -> int:
        io_bytes = 2 * rows * (d_in + d_out) * _itemsize(x.dtype)
        work_bytes = 2 * rows * widest * 4  # f32 activation working set
        return weight_bytes + io_bytes + work_bytes

    vmem_cap = 48 << 20  # conservative: fits v5e/v6e (128 MiB) and v7x (64 MiB)
    while tm > 8 and _vmem_needed(tm) > vmem_cap:
        tm = _round_up(tm // 2, 8)

    n_pad = pl.cdiv(N, tm) * tm
    x_in = jnp.pad(x, ((0, n_pad - N), (0, 0))) if n_pad != N else x

    # Flatten (w, b) pairs; biases as f32 (1, D_out) rows for lane broadcast.
    flat_args = []
    in_specs = [pl.BlockSpec((tm, d_in), lambda i: (i, 0))]
    for (w, b) in params:
        di, do = w.shape
        flat_args.append(w)
        flat_args.append(b.reshape(1, do).astype(jnp.float32))
        # Constant-index full blocks -> weights/biases stay resident in VMEM.
        in_specs.append(pl.BlockSpec((di, do), lambda i: (0, 0)))
        in_specs.append(pl.BlockSpec((1, do), lambda i: (0, 0)))

    kernel = functools.partial(
        _mlp_kernel, num_layers=num_layers, compute_dtype=compute_dtype)

    flops = 2 * n_pad * sum(w.shape[0] * w.shape[1] for (w, _) in params)
    bytes_accessed = (n_pad * (d_in + d_out) * _itemsize(x.dtype)
                      + weight_bytes // 2)
    cost = pl.CostEstimate(flops=flops, transcendentals=0,
                           bytes_accessed=bytes_accessed)

    out = pl.pallas_call(
        kernel,
        out_shape=jax.ShapeDtypeStruct((n_pad, d_out), x.dtype),
        grid_spec=pltpu.PrefetchScalarGridSpec(
            num_scalar_prefetch=0,
            grid=(n_pad // tm,),
            in_specs=in_specs,
            out_specs=pl.BlockSpec((tm, d_out), lambda i: (i, 0)),
        ),
        compiler_params=pltpu.CompilerParams(
            dimension_semantics=("parallel",),  # row tiles shard across TCs
            vmem_limit_bytes=min(max(_vmem_needed(tm) * 2, 16 << 20), 64 << 20),
        ),
        cost_estimate=cost,
    )(x_in, *flat_args)

    return out[:N] if n_pad != N else out


def init_params(key, dimensions, dtype=jnp.float32):
    """torch nn.Linear-style init: U(-1/sqrt(fan_in), 1/sqrt(fan_in))."""
    params = []
    for i in range(len(dimensions) - 1):
        d_in, d_out = dimensions[i], dimensions[i + 1]
        key, kw, kb = jax.random.split(key, 3)
        bound = 1.0 / (d_in ** 0.5)
        w = jax.random.uniform(kw, (d_in, d_out), dtype, -bound, bound)
        b = jax.random.uniform(kb, (d_out,), dtype, -bound, bound)
        params.append((w, b))
    return params


def _reference(x, params):
    out = x
    for i, (w, b) in enumerate(params):
        if i > 0:
            out = jnp.maximum(out, 0.0)
        out = out @ w + b
    return out


if __name__ == "__main__":
    # Linears(dimensions=[32, 128, 64, 16]) on a ragged batch of 200 rows:
    # exercises the fused multi-layer loop, multi-tile grid, and row padding.
    dimensions = [32, 128, 64, 16]
    N = 200

    key = jax.random.PRNGKey(0)
    key, kx = jax.random.split(key)
    x = jax.random.normal(kx, (N, dimensions[0]), jnp.float32)
    params = init_params(key, dimensions)

    out = jax.block_until_ready(linears_forward(x, params, tm=128))
    ref = _reference(x, params)

    assert out.shape == (N, dimensions[-1]), out.shape
    assert jnp.allclose(out, ref, atol=1e-4, rtol=1e-4), "mismatch vs reference"
    print("KERNEL_OK")
</pallas_src>

<mosaic_0001>
module attributes {stable_mosaic.version = 11 : i64} {
  func.func @_mlp_kernel(%arg0: i32, %arg1: memref<128x32xf32, #tpu.memory_space<vmem>>, %arg2: memref<32x128xf32, #tpu.memory_space<vmem>>, %arg3: memref<1x128xf32, #tpu.memory_space<vmem>>, %arg4: memref<128x64xf32, #tpu.memory_space<vmem>>, %arg5: memref<1x64xf32, #tpu.memory_space<vmem>>, %arg6: memref<64x16xf32, #tpu.memory_space<vmem>>, %arg7: memref<1x16xf32, #tpu.memory_space<vmem>>, %arg8: memref<128x16xf32, #tpu.memory_space<vmem>>) attributes {dimension_semantics = [#tpu.dimension_semantics<parallel>], iteration_bounds = array<i64: 2>, scalar_prefetch = 0 : i64, scratch_operands = 0 : i64, tpu.core_type = #tpu.core_type<tc>, window_params = [{transform_indices = @transform_0, window_bounds = array<i64: 128, 32>}, {pipeline_mode = #tpu.pipeline_mode<synchronous>, transform_indices = @transform_1, window_bounds = array<i64: 32, 128>}, {pipeline_mode = #tpu.pipeline_mode<synchronous>, transform_indices = @transform_2, window_bounds = array<i64: 1, 128>}, {pipeline_mode = #tpu.pipeline_mode<synchronous>, transform_indices = @transform_3, window_bounds = array<i64: 128, 64>}, {pipeline_mode = #tpu.pipeline_mode<synchronous>, transform_indices = @transform_4, window_bounds = array<i64: 1, 64>}, {pipeline_mode = #tpu.pipeline_mode<synchronous>, transform_indices = @transform_5, window_bounds = array<i64: 64, 16>}, {pipeline_mode = #tpu.pipeline_mode<synchronous>, transform_indices = @transform_6, window_bounds = array<i64: 1, 16>}, {transform_indices = @transform_7, window_bounds = array<i64: 128, 16>}]} {
    %c0 = arith.constant 0 : index
    %c0_0 = arith.constant 0 : index
    %0 = vector.load %arg1[%c0, %c0_0] : memref<128x32xf32, #tpu.memory_space<vmem>>, vector<128x32xf32>
    %c0_1 = arith.constant 0 : index
    %c0_2 = arith.constant 0 : index
    %1 = vector.load %arg2[%c0_1, %c0_2] : memref<32x128xf32, #tpu.memory_space<vmem>>, vector<32x128xf32>
    %cst = arith.constant dense<0.000000e+00> : vector<128x128xf32>
    %2 = tpu.matmul %0, %1, %cst {dimension_numbers = #tpu.dot_dimension_numbers<[1], [0], [0], [1], [0, 0, 1, 1], [], []>} : vector<128x32xf32>, vector<32x128xf32>, vector<128x128xf32> -> vector<128x128xf32>
    %c0_3 = arith.constant 0 : index
    %c0_4 = arith.constant 0 : index
    %3 = vector.load %arg3[%c0_3, %c0_4] : memref<1x128xf32, #tpu.memory_space<vmem>>, vector<1x128xf32>
    %4 = vector.broadcast %3 : vector<1x128xf32> to vector<128x128xf32>
    %5 = arith.addf %2, %4 : vector<128x128xf32>
    %cst_5 = arith.constant 0.000000e+00 : f32
    %6 = vector.broadcast %cst_5 : f32 to vector<128x128xf32>
    %7 = arith.maximumf %5, %6 : vector<128x128xf32>
    %c0_6 = arith.constant 0 : index
    %c0_7 = arith.constant 0 : index
    %8 = vector.load %arg4[%c0_6, %c0_7] : memref<128x64xf32, #tpu.memory_space<vmem>>, vector<128x64xf32>
    %cst_8 = arith.constant dense<0.000000e+00> : vector<128x64xf32>
    %9 = tpu.matmul %7, %8, %cst_8 {dimension_numbers = #tpu.dot_dimension_numbers<[1], [0], [0], [1], [0, 0, 1, 1], [], []>} : vector<128x128xf32>, vector<128x64xf32>, vector<128x64xf32> -> vector<128x64xf32>
    %c0_9 = arith.constant 0 : index
    %c0_10 = arith.constant 0 : index
    %10 = vector.load %arg5[%c0_9, %c0_10] : memref<1x64xf32, #tpu.memory_space<vmem>>, vector<1x64xf32>
    %11 = vector.broadcast %10 : vector<1x64xf32> to vector<128x64xf32>
    %12 = arith.addf %9, %11 : vector<128x64xf32>
    %cst_11 = arith.constant 0.000000e+00 : f32
    %13 = vector.broadcast %cst_11 : f32 to vector<128x64xf32>
    %14 = arith.maximumf %12, %13 : vector<128x64xf32>
    %c0_12 = arith.constant 0 : index
    %c0_13 = arith.constant 0 : index
    %15 = vector.load %arg6[%c0_12, %c0_13] : memref<64x16xf32, #tpu.memory_space<vmem>>, vector<64x16xf32>
    %cst_14 = arith.constant dense<0.000000e+00> : vector<128x16xf32>
    %16 = tpu.matmul %14, %15, %cst_14 {dimension_numbers = #tpu.dot_dimension_numbers<[1], [0], [0], [1], [0, 0, 1, 1], [], []>} : vector<128x64xf32>, vector<64x16xf32>, vector<128x16xf32> -> vector<128x16xf32>
    %c0_15 = arith.constant 0 : index
    %c0_16 = arith.constant 0 : index
    %17 = vector.load %arg7[%c0_15, %c0_16] : memref<1x16xf32, #tpu.memory_space<vmem>>, vector<1x16xf32>
    %18 = vector.broadcast %17 : vector<1x16xf32> to vector<128x16xf32>
    %19 = arith.addf %16, %18 : vector<128x16xf32>
    %c0_17 = arith.constant 0 : index
    %c0_18 = arith.constant 0 : index
    %20 = vector.load %arg8[%c0_17, %c0_18] : memref<128x16xf32, #tpu.memory_space<vmem>>, vector<128x16xf32>
    tpu.vector_store %arg8[%c0_17, %c0_18], %19 {strides = array<i32>} : memref<128x16xf32, #tpu.memory_space<vmem>>, vector<128x16xf32>,
    return
  }
  func.func @transform_0(%arg0: i32) -> (i32, i32) {
    %c0_i32 = arith.constant 0 : i32
    %c0_i32_0 = arith.constant 0 : i32
    return %arg0, %c0_i32 : i32, i32
  }
  func.func @transform_1(%arg0: i32) -> (i32, i32) {
    %c0_i32 = arith.constant 0 : i32
    %c0_i32_0 = arith.constant 0 : i32
    %c0_i32_1 = arith.constant 0 : i32
    return %c0_i32, %c0_i32_0 : i32, i32
  }
  func.func @transform_2(%arg0: i32) -> (i32, i32) {
    %c0_i32 = arith.constant 0 : i32
    %c0_i32_0 = arith.constant 0 : i32
    %c0_i32_1 = arith.constant 0 : i32
    return %c0_i32, %c0_i32_0 : i32, i32
  }
  func.func @transform_3(%arg0: i32) -> (i32, i32) {
    %c0_i32 = arith.constant 0 : i32
    %c0_i32_0 = arith.constant 0 : i32
    %c0_i32_1 = arith.constant 0 : i32
    return %c0_i32, %c0_i32_0 : i32, i32
  }
  func.func @transform_4(%arg0: i32) -> (i32, i32) {
    %c0_i32 = arith.constant 0 : i32
    %c0_i32_0 = arith.constant 0 : i32
    %c0_i32_1 = arith.constant 0 : i32
    return %c0_i32, %c0_i32_0 : i32, i32
  }
  func.func @transform_5(%arg0: i32) -> (i32, i32) {
    %c0_i32 = arith.constant 0 : i32
    %c0_i32_0 = arith.constant 0 : i32
    %c0_i32_1 = arith.constant 0 : i32
    return %c0_i32, %c0_i32_0 : i32, i32
  }
  func.func @transform_6(%arg0: i32) -> (i32, i32) {
    %c0_i32 = arith.constant 0 : i32
    %c0_i32_0 = arith.constant 0 : i32
    %c0_i32_1 = arith.constant 0 : i32
    return %c0_i32, %c0_i32_0 : i32, i32
  }
  func.func @transform_7(%arg0: i32) -> (i32, i32) {
    %c0_i32 = arith.constant 0 : i32
    %c0_i32_0 = arith.constant 0 : i32
    return %arg0, %c0_i32 : i32, i32
  }
}

</mosaic_0001>

<llo_original>
// kernel: tpu_custom_call.1
$region0: #{tpu_custom_call.1}
  #allocation0 [shape = 'u32[]', space=smem, size = 0x4, offset = 0x4, fixed_abs, tag = 'smem constant byte address 0x4 - core index']
  #allocation1 [shape = 'u32[72,128]{1,0:T(1,128)}', space=vmem, size = 0x9000, scoped, tag = 'internal scratch']
  %s0 = inlined_call_operand.vmem [shape: f32[256,32], index: 0, kind: input, shape index: {}]
  %s1 = inlined_call_operand.vmem [shape: f32[32,128], index: 1, kind: input, shape index: {}]
  %s2 = inlined_call_operand.vmem [shape: f32[1,128], index: 2, kind: input, shape index: {}]
  %s3 = inlined_call_operand.vmem [shape: f32[128,64], index: 3, kind: input, shape index: {}]
  %s4 = inlined_call_operand.vmem [shape: f32[1,64], index: 4, kind: input, shape index: {}]
  %s5 = inlined_call_operand.vmem [shape: f32[64,16], index: 5, kind: input, shape index: {}]
  %s6 = inlined_call_operand.vmem [shape: f32[1,16], index: 6, kind: input, shape index: {}]
  %s7 = inlined_call_operand.vmem [shape: f32[256,16], index: 7, kind: output, shape index: {}]
  %s8 = sld [smem:[#allocation0]]
  $region61: #{tpu_custom_call.1} parent=0
    _
  %s10 = ssub.s32 1, %s8
  %s11 = scalar_select 0, %s10, %s8
  loop: start=0, step=1, limit=4
  $region2: #{tpu_custom_call.1} parent=0 // loop_pre_header
    _
  $region3: #{tpu_custom_call.1} parent=0 // loop_header
    %s13 = sphi 0, %s17
    %p14 = scmp.ge.s32.totalorder %s13, 4
    %s23 = sphi 0, %s25
    %s26 = sphi 0, %s23
    %s27 = sphi 0, %s26
    %s43 = sphi 0, %s27
    %s47 = sphi 0, %s47
    %s49 = sphi 0, %s47
    %s50 = sphi 0, %s49
    %s64 = sphi 0, %s50
    %s68 = sphi 0, %s68
    %s70 = sphi 0, %s68
    %s71 = sphi 0, %s70
    %s85 = sphi 0, %s71
    %s89 = sphi 0, %s89
    %s91 = sphi 0, %s89
    %s92 = sphi 0, %s91
    %s106 = sphi 0, %s92
    %s110 = sphi 0, %s110
    %s112 = sphi 0, %s110
    %s113 = sphi 0, %s112
    %s127 = sphi 0, %s113
    %s131 = sphi 0, %s131
    %s133 = sphi 0, %s131
    %s134 = sphi 0, %s133
    %s148 = sphi 0, %s134
    %s152 = sphi 0, %s152
    %s154 = sphi 0, %s152
    %s155 = sphi 0, %s154
    %s169 = sphi 0, %s155
    %s175 = sphi 0, %s177
    %s178 = sphi 0, %s175
    %s179 = sphi 0, %s178
    %s195 = sphi 0, %s179
  $region4: #{tpu_custom_call.1} parent=0 // loop_header_branch
    %16 = sbr.rel (%p14) target = $region8
  $region5: #{tpu_custom_call.1} parent=0 // loop_body
    %s18 = ssub.s32 %s13, 1
    %s19 = ssub.s32 %s13, 2
    %s20 = sadd.s32 %s13, 1
    %s21 = ssub.s32 %s13, %s20
    %p22 = scmp.eq.s32.totalorder %s21, 0
    %s24 = sadd.s32 %s23, 1
    %s25 = scalar_select %p22, %s23, %s24
    %p28 = pneg %p22
    %p29 = scmp.eq.s32.totalorder %s13, 1
    %p30 = por %p28, %p29
    %p31 = scmp.ne.s32.totalorder %s23, %s26
    %p32 = scmp.eq.s32.totalorder %s13, 0
    %p33 = por %p31, %p32
    %p34 = scmp.ne.s32.totalorder %s23, %s26
    %p35 = scmp.eq.s32.totalorder %s18, 1
    %p36 = por %p34, %p35
    %p37 = scmp.ne.s32.totalorder %s26, %s27
    %p38 = scmp.eq.s32.totalorder %s18, 0
    %p39 = por %p37, %p38
    %p40 = scmp.ne.s32.totalorder %s26, %s27
    %p41 = scmp.eq.s32.totalorder %s19, 1
    %p42 = por %p40, %p41
    %p44 = scmp.ne.s32.totalorder %s27, %s43
    %p45 = scmp.eq.s32.totalorder %s19, 0
    %p46 = por %p44, %p45
    %s48 = sadd.s32 %s47, 1
    %p51 = scmp.eq.s32.totalorder %s13, 1
    %p52 = scmp.ne.s32.totalorder %s47, %s49
    %p53 = scmp.eq.s32.totalorder %s13, 0
    %p54 = por %p52, %p53
    %p55 = scmp.ne.s32.totalorder %s47, %s49
    %p56 = scmp.eq.s32.totalorder %s18, 1
    %p57 = por %p55, %p56
    %p58 = scmp.ne.s32.totalorder %s49, %s50
    %p59 = scmp.eq.s32.totalorder %s18, 0
    %p60 = por %p58, %p59
    %p61 = scmp.ne.s32.totalorder %s49, %s50
    %p62 = scmp.eq.s32.totalorder %s19, 1
    %p63 = por %p61, %p62
    %p65 = scmp.ne.s32.totalorder %s50, %s64
    %p66 = scmp.eq.s32.totalorder %s19, 0
    %p67 = por %p65, %p66
    %s69 = sadd.s32 %s68, 1
    %p72 = scmp.eq.s32.totalorder %s13, 1
    %p73 = scmp.ne.s32.totalorder %s68, %s70
    %p74 = scmp.eq.s32.totalorder %s13, 0
    %p75 = por %p73, %p74
    %p76 = scmp.ne.s32.totalorder %s68, %s70
    %p77 = scmp.eq.s32.totalorder %s18, 1
    %p78 = por %p76, %p77
    %p79 = scmp.ne.s32.totalorder %s70, %s71
    %p80 = scmp.eq.s32.totalorder %s18, 0
    %p81 = por %p79, %p80
    %p82 = scmp.ne.s32.totalorder %s70, %s71
    %p83 = scmp.eq.s32.totalorder %s19, 1
    %p84 = por %p82, %p83
    %p86 = scmp.ne.s32.totalorder %s71, %s85
    %p87 = scmp.eq.s32.totalorder %s19, 0
    %p88 = por %p86, %p87
    %s90 = sadd.s32 %s89, 1
    %p93 = scmp.eq.s32.totalorder %s13, 1
    %p94 = scmp.ne.s32.totalorder %s89, %s91
    %p95 = scmp.eq.s32.totalorder %s13, 0
    %p96 = por %p94, %p95
    %p97 = scmp.ne.s32.totalorder %s89, %s91
    %p98 = scmp.eq.s32.totalorder %s18, 1
    %p99 = por %p97, %p98
    %p100 = scmp.ne.s32.totalorder %s91, %s92
    %p101 = scmp.eq.s32.totalorder %s18, 0
    %p102 = por %p100, %p101
    %p103 = scmp.ne.s32.totalorder %s91, %s92
    %p104 = scmp.eq.s32.totalorder %s19, 1
    %p105 = por %p103, %p104
    %p107 = scmp.ne.s32.totalorder %s92, %s106
    %p108 = scmp.eq.s32.totalorder %s19, 0
    %p109 = por %p107, %p108
    %s111 = sadd.s32 %s110, 1
    %p114 = scmp.eq.s32.totalorder %s13, 1
    %p115 = scmp.ne.s32.totalorder %s110, %s112
    %p116 = scmp.eq.s32.totalorder %s13, 0
    %p117 = por %p115, %p116
    %p118 = scmp.ne.s32.totalorder %s110, %s112
    %p119 = scmp.eq.s32.totalorder %s18, 1
    %p120 = por %p118, %p119
    %p121 = scmp.ne.s32.totalorder %s112, %s113
    %p122 = scmp.eq.s32.totalorder %s18, 0
    %p123 = por %p121, %p122
    %p124 = scmp.ne.s32.totalorder %s112, %s113
    %p125 = scmp.eq.s32.totalorder %s19, 1
    %p126 = por %p124, %p125
    %p128 = scmp.ne.s32.totalorder %s113, %s127
    %p129 = scmp.eq.s32.totalorder %s19, 0
    %p130 = por %p128, %p129
    %s132 = sadd.s32 %s131, 1
    %p135 = scmp.eq.s32.totalorder %s13, 1
    %p136 = scmp.ne.s32.totalorder %s131, %s133
    %p137 = scmp.eq.s32.totalorder %s13, 0
    %p138 = por %p136, %p137
    %p139 = scmp.ne.s32.totalorder %s131, %s133
    %p140 = scmp.eq.s32.totalorder %s18, 1
    %p141 = por %p139, %p140
    %p142 = scmp.ne.s32.totalorder %s133, %s134
    %p143 = scmp.eq.s32.totalorder %s18, 0
    %p144 = por %p142, %p143
    %p145 = scmp.ne.s32.totalorder %s133, %s134
    %p146 = scmp.eq.s32.totalorder %s19, 1
    %p147 = por %p145, %p146
    %p149 = scmp.ne.s32.totalorder %s134, %s148
    %p150 = scmp.eq.s32.totalorder %s19, 0
    %p151 = por %p149, %p150
    %s153 = sadd.s32 %s152, 1
    %p156 = scmp.eq.s32.totalorder %s13, 1
    %p157 = scmp.ne.s32.totalorder %s152, %s154
    %p158 = scmp.eq.s32.totalorder %s13, 0
    %p159 = por %p157, %p158
    %p160 = scmp.ne.s32.totalorder %s152, %s154
    %p161 = scmp.eq.s32.totalorder %s18, 1
    %p162 = por %p160, %p161
    %p163 = scmp.ne.s32.totalorder %s154, %s155
    %p164 = scmp.eq.s32.totalorder %s18, 0
    %p165 = por %p163, %p164
    %p166 = scmp.ne.s32.totalorder %s154, %s155
    %p167 = scmp.eq.s32.totalorder %s19, 1
    %p168 = por %p166, %p167
    %p170 = scmp.ne.s32.totalorder %s155, %s169
    %p171 = scmp.eq.s32.totalorder %s19, 0
    %p172 = por %p170, %p171
    %s173 = ssub.s32 %s13, %s20
    %p174 = scmp.eq.s32.totalorder %s173, 0
    %s176 = sadd.s32 %s175, 1
    %s177 = scalar_select %p174, %s175, %s176
    %p180 = pneg %p174
    %p181 = scmp.eq.s32.totalorder %s13, 1
    %p182 = por %p180, %p181
    %p183 = scmp.ne.s32.totalorder %s175, %s178
    %p184 = scmp.eq.s32.totalorder %s13, 0
    %p185 = por %p183, %p184
    %p186 = scmp.ne.s32.totalorder %s175, %s178
    %p187 = scmp.eq.s32.totalorder %s18, 1
    %p188 = por %p186, %p187
    %p189 = scmp.ne.s32.totalorder %s178, %s179
    %p190 = scmp.eq.s32.totalorder %s18, 0
    %p191 = por %p189, %p190
    %p192 = scmp.ne.s32.totalorder %s178, %s179
    %p193 = scmp.eq.s32.totalorder %s19, 1
    %p194 = por %p192, %p193
    %p196 = scmp.ne.s32.totalorder %s179, %s195
    %p197 = scmp.eq.s32.totalorder %s19, 0
    %p198 = por %p196, %p197
    %p199 = scmp.le.s32.totalorder 1, %s13
    %p200 = scmp.lt.s32.totalorder %s13, 3
    %p201 = pnand %p199, %p200
    %p202 = pneg %p201
    // Predicated region
    $region9: #{tpu_custom_call.1} parent=5 // pred_check
      _
    $region10: #{tpu_custom_call.1} parent=5 // pred_check_branch
      %204 = sbr.rel (%p201) target = $region12
    $region11: #{tpu_custom_call.1} parent=5 // pred_region
      %s205 = ssub.s32 %s13, 1
      // Predicated region
      $region13: #{tpu_custom_call.1} parent=11 // pred_check
        %p206 = pneg %p60
      $region14: #{tpu_custom_call.1} parent=11 // pred_check_branch
        %208 = sbr.rel (%p206) target = $region16
      $region15: #{tpu_custom_call.1} parent=11 // pred_region
        _
      $region16: #{tpu_custom_call.1} parent=11 // pred_fallthru
        _
      // Predicated region
      $region17: #{tpu_custom_call.1} parent=11 // pred_check
        %p209 = pneg %p81
      $region18: #{tpu_custom_call.1} parent=11 // pred_check_branch
        %211 = sbr.rel (%p209) target = $region20
      $region19: #{tpu_custom_call.1} parent=11 // pred_region
        _
      $region20: #{tpu_custom_call.1} parent=11 // pred_fallthru
        _
      // Predicated region
      $region21: #{tpu_custom_call.1} parent=11 // pred_check
        %p212 = pneg %p102
      $region22: #{tpu_custom_call.1} parent=11 // pred_check_branch
        %214 = sbr.rel (%p212) target = $region24
      $region23: #{tpu_custom_call.1} parent=11 // pred_region
        _
      $region24: #{tpu_custom_call.1} parent=11 // pred_fallthru
        _
      // Predicated region
      $region25: #{tpu_custom_call.1} parent=11 // pred_check
        %p215 = pneg %p123
      $region26: #{tpu_custom_call.1} parent=11 // pred_check_branch
        %217 = sbr.rel (%p215) target = $region28
      $region27: #{tpu_custom_call.1} parent=11 // pred_region
        _
      $region28: #{tpu_custom_call.1} parent=11 // pred_fallthru
        _
      // Predicated region
      $region29: #{tpu_custom_call.1} parent=11 // pred_check
        %p218 = pneg %p144
      $region30: #{tpu_custom_call.1} parent=11 // pred_check_branch
        %220 = sbr.rel (%p218) target = $region32
      $region31: #{tpu_custom_call.1} parent=11 // pred_region
        _
      $region32: #{tpu_custom_call.1} parent=11 // pred_fallthru
        _
      // Predicated region
      $region33: #{tpu_custom_call.1} parent=11 // pred_check
        %p221 = pneg %p165
      $region34: #{tpu_custom_call.1} parent=11 // pred_check_branch
        %223 = sbr.rel (%p221) target = $region36
      $region35: #{tpu_custom_call.1} parent=11 // pred_region
        _
      $region36: #{tpu_custom_call.1} parent=11 // pred_fallthru
        _
    $region12: #{tpu_custom_call.1} parent=5 // pred_fallthru
      _
    %p224 = scmp.lt.s32.totalorder %s13, 2
    // Predicated region
    $region37: #{tpu_custom_call.1} parent=5 // pred_check
      %p225 = pneg %p224
    $region38: #{tpu_custom_call.1} parent=5 // pred_check_branch
      %227 = sbr.rel (%p225) target = $region40
    $region39: #{tpu_custom_call.1} parent=5 // pred_region
      // Predicated region
      $region41: #{tpu_custom_call.1} parent=39 // pred_check
        %p228 = pneg %p33
      $region42: #{tpu_custom_call.1} parent=39 // pred_check_branch
        %230 = sbr.rel (%p228) target = $region44
      $region43: #{tpu_custom_call.1} parent=39 // pred_region
        %s231 = smul.u32 16, %s13
        %p232 = scmp.lt.s32.totalorder %s231, 31
        %s233 = scalar_select %p232, %s231, 31
        %s234 = smul.addr %s233, 8
        %s235 = scalar_lea.vmem %s0, %s234
        %s236 = smul.u32 16, %s13
      $region44: #{tpu_custom_call.1} parent=39 // pred_fallthru
        _
    $region40: #{tpu_custom_call.1} parent=5 // pred_fallthru
      _
    %p237 = scmp.le.s32.totalorder 1, %s13
    %p238 = scmp.lt.s32.totalorder %s13, 3
    %p239 = pnand %p237, %p238
    %p240 = pneg %p239
    // Predicated region
    $region45: #{tpu_custom_call.1} parent=5 // pred_check
      _
    $region46: #{tpu_custom_call.1} parent=5 // pred_check_branch
      %242 = sbr.rel (%p239) target = $region48
    $region47: #{tpu_custom_call.1} parent=5 // pred_region
      %s243 = ssub.s32 %s13, 1
      %s244 = smul.u32 16, %s18
      %p245 = scmp.lt.s32.totalorder %s244, 31
      %s246 = scalar_select %p245, %s244, 31
      %s247 = smul.addr %s246, 8
      %s248 = scalar_lea.vmem %s0, %s247
      %p249 = pneg %p39
      %p250 = pneg %p36
      %p251 = pneg %p60
      %p252 = pneg %p57
      %p253 = pneg %p81
      %p254 = pneg %p78
      %p255 = pneg %p102
      %p256 = pneg %p99
      %p257 = pneg %p123
      %p258 = pneg %p120
      %p259 = pneg %p144
      %p260 = pneg %p141
      %p261 = pneg %p165
      %p262 = pneg %p162
      %p263 = pneg %p191
      %p264 = pneg %p188
      %s265 = smul.u32 16, %s18
      %p266 = scmp.lt.s32.totalorder %s265, 31
      %s267 = scalar_select %p266, %s265, 31
      %s268 = smul.addr %s267, 8
      %s269 = scalar_lea.vmem %s7, %s268
      %s270 = smul.u32 16, %s18
      %p271 = scmp.lt.s32.totalorder %s270, 31
      %s272 = scalar_select %p271, %s270, 31
      %s273 = smul.addr %s272, 8
      %s274 = scalar_lea.vmem %s0, %s273
      %s275 = smul.u32 16, %s18
      %s276 = smul.u32 16, %s18
      %p277 = scmp.lt.s32.totalorder %s276, 31
      %s278 = scalar_select %p277, %s276, 31
      %s279 = smul.addr %s278, 8
      %s280 = scalar_lea.vmem %s7, %s279
      %s281 = smul.u32 16, %s18
      %v282 = vld [vmem:[%s274] sm:$0xff]
      %v283 = vld [vmem:[%s274 + $0x8] sm:$0xff]
      %v284 = vld [vmem:[%s274 + $0x10] sm:$0xff]
      %v285 = vld [vmem:[%s274 + $0x18] sm:$0xff]
      %v286 = vld [vmem:[%s274 + $0x20] sm:$0xff]
      %v287 = vld [vmem:[%s274 + $0x28] sm:$0xff]
      %v288 = vld [vmem:[%s274 + $0x30] sm:$0xff]
      %v289 = vld [vmem:[%s274 + $0x38] sm:$0xff]
      %v290 = vld [vmem:[%s274 + $0x40] sm:$0xff]
      %v291 = vld [vmem:[%s274 + $0x48] sm:$0xff]
      %v292 = vld [vmem:[%s274 + $0x50] sm:$0xff]
      %v293 = vld [vmem:[%s274 + $0x58] sm:$0xff]
      %v294 = vld [vmem:[%s274 + $0x60] sm:$0xff]
      %v295 = vld [vmem:[%s274 + $0x68] sm:$0xff]
      %v296 = vld [vmem:[%s274 + $0x70] sm:$0xff]
      %v297 = vld [vmem:[%s274 + $0x78] sm:$0xff]
      %v298 = vld [vmem:[%s1] sm:$0xff]
      %v299 = vld [vmem:[%s1 + $0x8] sm:$0xff]
      %v300 = vld [vmem:[%s1 + $0x10] sm:$0xff]
      %v301 = vld [vmem:[%s1 + $0x18] sm:$0xff]
      %v302 = vld [vmem:[%s2] sm:$0x1]
      %v304 = vperm.slane %v302, 0
      %vm306 = vcmask 261120
      %v308 = vsel %vm306, %v282, 0
      %v311 = vsel %vm306, %v283, 0
      %v314 = vsel %vm306, %v284, 0
      %v317 = vsel %vm306, %v285, 0
      %v320 = vsel %vm306, %v286, 0
      %v323 = vsel %vm306, %v287, 0
      %v326 = vsel %vm306, %v288, 0
      %v329 = vsel %vm306, %v289, 0
      %v332 = vsel %vm306, %v290, 0
      %v335 = vsel %vm306, %v291, 0
      %v338 = vsel %vm306, %v292, 0
      %v341 = vsel %vm306, %v293, 0
      %v344 = vsel %vm306, %v294, 0
      %v347 = vsel %vm306, %v295, 0
      %v350 = vsel %vm306, %v296, 0
      %v353 = vsel %vm306, %v297, 0
      %355 = vmatpush.msra.mxu0 0.0
      %356 = vmatpush.msra.mxu0 0.0
      %357 = vmatpush.msra.mxu0 0.0
      %358 = vmatpush.msra.mxu0 0.0
      %359 = vmatpush.msra.mxu0 0.0
      %360 = vmatpush.msra.mxu0 0.0
      %361 = vmatpush.msra.mxu0 0.0
      %362 = vmatpush.msra.mxu0 0.0
      %363 = vmatpush.msra.mxu0 0.0
      %364 = vmatpush.msra.mxu0 0.0
      %365 = vmatpush.msra.mxu0 0.0
      %366 = vmatpush.msra.mxu0 0.0
      %367 = vmatpush.msra.mxu0 %v301
      %368 = vmatpush.msra.mxu0 %v300
      %369 = vmatpush.msra.mxu0 %v299
      %370 = vmatpush.msra.mxu0 %v298
      %371 = vmatmul.f32.gmra.mxu0 %v308
      %v372 = vpop.f32.mrf.mxu0
      %v373 = vadd.f32 %v304, %v372
      %374 = vmatmul.f32.gmra.mxu0 %v311
      %v375 = vpop.f32.mrf.mxu0
      %v376 = vadd.f32 %v304, %v375
      %377 = vmatmul.f32.gmra.mxu0 %v314
      %v378 = vpop.f32.mrf.mxu0
      %v379 = vadd.f32 %v304, %v378
      %380 = vmatmul.f32.gmra.mxu0 %v317
      %v381 = vpop.f32.mrf.mxu0
      %v382 = vadd.f32 %v304, %v381
      %383 = vmatmul.f32.gmra.mxu0 %v320
      %v384 = vpop.f32.mrf.mxu0
      %v385 = vadd.f32 %v304, %v384
      %386 = vmatmul.f32.gmra.mxu0 %v323
      %v387 = vpop.f32.mrf.mxu0
      %v388 = vadd.f32 %v304, %v387
      %389 = vmatmul.f32.gmra.mxu0 %v326
      %v390 = vpop.f32.mrf.mxu0
      %v391 = vadd.f32 %v304, %v390
      %392 = vmatmul.f32.gmra.mxu0 %v329
      %v393 = vpop.f32.mrf.mxu0
      %v394 = vadd.f32 %v304, %v393
      %395 = vmatmul.f32.gmra.mxu0 %v332
      %v396 = vpop.f32.mrf.mxu0
      %v397 = vadd.f32 %v304, %v396
      %398 = vmatmul.f32.gmra.mxu0 %v335
      %v399 = vpop.f32.mrf.mxu0
      %v400 = vadd.f32 %v304, %v399
      %401 = vmatmul.f32.gmra.mxu0 %v338
      %v402 = vpop.f32.mrf.mxu0
      %v403 = vadd.f32 %v304, %v402
      %404 = vmatmul.f32.gmra.mxu0 %v341
      %v405 = vpop.f32.mrf.mxu0
      %v406 = vadd.f32 %v304, %v405
      %407 = vmatmul.f32.gmra.mxu0 %v344
      %v408 = vpop.f32.mrf.mxu0
      %v409 = vadd.f32 %v304, %v408
      %410 = vmatmul.f32.gmra.mxu0 %v347
      %v411 = vpop.f32.mrf.mxu0
      %v412 = vadd.f32 %v304, %v411
      %413 = vmatmul.f32.gmra.mxu0 %v350
      %v414 = vpop.f32.mrf.mxu0
      %v415 = vadd.f32 %v304, %v414
      %416 = vmatmul.f32.gmra.mxu0 %v353
      %v417 = vpop.f32.mrf.mxu0
      %v418 = vadd.f32 %v304, %v417
      %419 = vdwg.mxu0
      %v420 = vmax.f32 %v373, 0.0
      %v421 = vmax.f32 %v376, 0.0
      %v422 = vmax.f32 %v379, 0.0
      %v423 = vmax.f32 %v382, 0.0
      %v424 = vmax.f32 %v385, 0.0
      %v425 = vmax.f32 %v388, 0.0
      %v426 = vmax.f32 %v391, 0.0
      %v427 = vmax.f32 %v394, 0.0
      %v428 = vmax.f32 %v397, 0.0
      %v429 = vmax.f32 %v400, 0.0
      %v430 = vmax.f32 %v403, 0.0
      %v431 = vmax.f32 %v406, 0.0
      %v432 = vmax.f32 %v409, 0.0
      %v433 = vmax.f32 %v412, 0.0
      %v434 = vmax.f32 %v415, 0.0
      %v435 = vmax.f32 %v418, 0.0
      %v436 = vld [vmem:[%s3] sm:$0xff]
      %v437 = vld [vmem:[%s3 + $0x8] sm:$0xff]
      %v438 = vld [vmem:[%s3 + $0x10] sm:$0xff]
      %v439 = vld [vmem:[%s3 + $0x18] sm:$0xff]
      %v440 = vld [vmem:[%s3 + $0x20] sm:$0xff]
      %v441 = vld [vmem:[%s3 + $0x28] sm:$0xff]
      %v442 = vld [vmem:[%s3 + $0x30] sm:$0xff]
      %v443 = vld [vmem:[%s3 + $0x38] sm:$0xff]
      %v444 = vld [vmem:[%s3 + $0x40] sm:$0xff]
      %v445 = vld [vmem:[%s3 + $0x48] sm:$0xff]
      %v446 = vld [vmem:[%s3 + $0x50] sm:$0xff]
      %v447 = vld [vmem:[%s3 + $0x58] sm:$0xff]
      %v448 = vld [vmem:[%s3 + $0x60] sm:$0xff]
      %v449 = vld [vmem:[%s3 + $0x68] sm:$0xff]
      %v450 = vld [vmem:[%s3 + $0x70] sm:$0xff]
      %v451 = vld [vmem:[%s3 + $0x78] sm:$0xff]
      %v452 = vld [vmem:[%s4] sm:$0x1]
      %v454 = vperm.slane %v452, 0
      %456 = vmatpush.msra.mxu0 %v451
      %457 = vmatpush.msra.mxu0 %v450
      %458 = vmatpush.msra.mxu0 %v449
      %459 = vmatpush.msra.mxu0 %v448
      %460 = vmatpush.msra.mxu0 %v447
      %461 = vmatpush.msra.mxu0 %v446
      %462 = vmatpush.msra.mxu0 %v445
      %463 = vmatpush.msra.mxu0 %v444
      %464 = vmatpush.msra.mxu0 %v443
      %465 = vmatpush.msra.mxu0 %v442
      %466 = vmatpush.msra.mxu0 %v441
      %467 = vmatpush.msra.mxu0 %v440
      %468 = vmatpush.msra.mxu0 %v439
      %469 = vmatpush.msra.mxu0 %v438
      %470 = vmatpush.msra.mxu0 %v437
      %471 = vmatpush.msra.mxu0 %v436
      %472 = vmatmul.f32.gmra.mxu0 %v420
      %v473 = vpop.f32.mrf.mxu0
      %v474 = vadd.f32 %v454, %v473
      %475 = vmatmul.f32.gmra.mxu0 %v421
      %v476 = vpop.f32.mrf.mxu0
      %v477 = vadd.f32 %v454, %v476
      %478 = vmatmul.f32.gmra.mxu0 %v422
      %v479 = vpop.f32.mrf.mxu0
      %v480 = vadd.f32 %v454, %v479
      %481 = vmatmul.f32.gmra.mxu0 %v423
      %v482 = vpop.f32.mrf.mxu0
      %v483 = vadd.f32 %v454, %v482
      %484 = vmatmul.f32.gmra.mxu0 %v424
      %v485 = vpop.f32.mrf.mxu0
      %v486 = vadd.f32 %v454, %v485
      %487 = vmatmul.f32.gmra.mxu0 %v425
      %v488 = vpop.f32.mrf.mxu0
      %v489 = vadd.f32 %v454, %v488
      %490 = vmatmul.f32.gmra.mxu0 %v426
      %v491 = vpop.f32.mrf.mxu0
      %v492 = vadd.f32 %v454, %v491
      %493 = vmatmul.f32.gmra.mxu0 %v427
      %v494 = vpop.f32.mrf.mxu0
      %v495 = vadd.f32 %v454, %v494
      %496 = vmatmul.f32.gmra.mxu0 %v428
      %v497 = vpop.f32.mrf.mxu0
      %v498 = vadd.f32 %v454, %v497
      %499 = vmatmul.f32.gmra.mxu0 %v429
      %v500 = vpop.f32.mrf.mxu0
      %v501 = vadd.f32 %v454, %v500
      %502 = vmatmul.f32.gmra.mxu0 %v430
      %v503 = vpop.f32.mrf.mxu0
      %v504 = vadd.f32 %v454, %v503
      %505 = vmatmul.f32.gmra.mxu0 %v431
      %v506 = vpop.f32.mrf.mxu0
      %v507 = vadd.f32 %v454, %v506
      %508 = vmatmul.f32.gmra.mxu0 %v432
      %v509 = vpop.f32.mrf.mxu0
      %v510 = vadd.f32 %v454, %v509
      %511 = vmatmul.f32.gmra.mxu0 %v433
      %v512 = vpop.f32.mrf.mxu0
      %v513 = vadd.f32 %v454, %v512
      %514 = vmatmul.f32.gmra.mxu0 %v434
      %v515 = vpop.f32.mrf.mxu0
      %v516 = vadd.f32 %v454, %v515
      %517 = vmatmul.f32.gmra.mxu0 %v435
      %v518 = vpop.f32.mrf.mxu0
      %v519 = vadd.f32 %v454, %v518
      %520 = vdwg.mxu0
      %v521 = vmax.f32 %v474, 0.0
      %v522 = vmax.f32 %v477, 0.0
      %v523 = vmax.f32 %v480, 0.0
      %v524 = vmax.f32 %v483, 0.0
      %v525 = vmax.f32 %v486, 0.0
      %v526 = vmax.f32 %v489, 0.0
      %v527 = vmax.f32 %v492, 0.0
      %v528 = vmax.f32 %v495, 0.0
      %v529 = vmax.f32 %v498, 0.0
      %v530 = vmax.f32 %v501, 0.0
      %v531 = vmax.f32 %v504, 0.0
      %v532 = vmax.f32 %v507, 0.0
      %v533 = vmax.f32 %v510, 0.0
      %v534 = vmax.f32 %v513, 0.0
      %v535 = vmax.f32 %v516, 0.0
      %v536 = vmax.f32 %v519, 0.0
      %v537 = vld [vmem:[%s5] sm:$0xff]
      %v538 = vld [vmem:[%s5 + $0x8] sm:$0xff]
      %v539 = vld [vmem:[%s5 + $0x10] sm:$0xff]
      %v540 = vld [vmem:[%s5 + $0x18] sm:$0xff]
      %v541 = vld [vmem:[%s5 + $0x20] sm:$0xff]
      %v542 = vld [vmem:[%s5 + $0x28] sm:$0xff]
      %v543 = vld [vmem:[%s5 + $0x30] sm:$0xff]
      %v544 = vld [vmem:[%s5 + $0x38] sm:$0xff]
      %v545 = vld [vmem:[%s6] sm:$0x1]
      %v547 = vperm.slane %v545, 0
      %vm549 = vcmask 523264
      %v551 = vsel %vm549, %v521, 0
      %v554 = vsel %vm549, %v522, 0
      %v557 = vsel %vm549, %v523, 0
      %v560 = vsel %vm549, %v524, 0
      %v563 = vsel %vm549, %v525, 0
      %v566 = vsel %vm549, %v526, 0
      %v569 = vsel %vm549, %v527, 0
      %v572 = vsel %vm549, %v528, 0
      %v575 = vsel %vm549, %v529, 0
      %v578 = vsel %vm549, %v530, 0
      %v581 = vsel %vm549, %v531, 0
      %v584 = vsel %vm549, %v532, 0
      %v587 = vsel %vm549, %v533, 0
      %v590 = vsel %vm549, %v534, 0
      %v593 = vsel %vm549, %v535, 0
      %v596 = vsel %vm549, %v536, 0
      %598 = vmatpush.msra.mxu0 0.0
      %599 = vmatpush.msra.mxu0 0.0
      %600 = vmatpush.msra.mxu0 0.0
      %601 = vmatpush.msra.mxu0 0.0
      %602 = vmatpush.msra.mxu0 0.0
      %603 = vmatpush.msra.mxu0 0.0
      %604 = vmatpush.msra.mxu0 0.0
      %605 = vmatpush.msra.mxu0 0.0
      %606 = vmatpush.msra.mxu0 %v544
      %607 = vmatpush.msra.mxu0 %v543
      %608 = vmatpush.msra.mxu0 %v542
      %609 = vmatpush.msra.mxu0 %v541
      %610 = vmatpush.msra.mxu0 %v540
      %611 = vmatpush.msra.mxu0 %v539
      %612 = vmatpush.msra.mxu0 %v538
      %613 = vmatpush.msra.mxu0 %v537
      %614 = vmatmul.f32.gmra.mxu0 %v551
      %v615 = vpop.f32.mrf.mxu0
      %v616 = vadd.f32 %v547, %v615
      %617 = vmatmul.f32.gmra.mxu0 %v554
      %v618 = vpop.f32.mrf.mxu0
      %v619 = vadd.f32 %v547, %v618
      %620 = vmatmul.f32.gmra.mxu0 %v557
      %v621 = vpop.f32.mrf.mxu0
      %v622 = vadd.f32 %v547, %v621
      %623 = vmatmul.f32.gmra.mxu0 %v560
      %v624 = vpop.f32.mrf.mxu0
      %v625 = vadd.f32 %v547, %v624
      %626 = vmatmul.f32.gmra.mxu0 %v563
      %v627 = vpop.f32.mrf.mxu0
      %v628 = vadd.f32 %v547, %v627
      %629 = vmatmul.f32.gmra.mxu0 %v566
      %v630 = vpop.f32.mrf.mxu0
      %v631 = vadd.f32 %v547, %v630
      %632 = vmatmul.f32.gmra.mxu0 %v569
      %v633 = vpop.f32.mrf.mxu0
      %v634 = vadd.f32 %v547, %v633
      %635 = vmatmul.f32.gmra.mxu0 %v572
      %v636 = vpop.f32.mrf.mxu0
      %v637 = vadd.f32 %v547, %v636
      %638 = vmatmul.f32.gmra.mxu0 %v575
      %v639 = vpop.f32.mrf.mxu0
      %v640 = vadd.f32 %v547, %v639
      %641 = vmatmul.f32.gmra.mxu0 %v578
      %v642 = vpop.f32.mrf.mxu0
      %v643 = vadd.f32 %v547, %v642
      %644 = vmatmul.f32.gmra.mxu0 %v581
      %v645 = vpop.f32.mrf.mxu0
      %v646 = vadd.f32 %v547, %v645
      %647 = vmatmul.f32.gmra.mxu0 %v584
      %v648 = vpop.f32.mrf.mxu0
      %v649 = vadd.f32 %v547, %v648
      %650 = vmatmul.f32.gmra.mxu0 %v587
      %v651 = vpop.f32.mrf.mxu0
      %v652 = vadd.f32 %v547, %v651
      %653 = vmatmul.f32.gmra.mxu0 %v590
      %v654 = vpop.f32.mrf.mxu0
      %v655 = vadd.f32 %v547, %v654
      %656 = vmatmul.f32.gmra.mxu0 %v593
      %v657 = vpop.f32.mrf.mxu0
      %v658 = vadd.f32 %v547, %v657
      %659 = vmatmul.f32.gmra.mxu0 %v596
      %v660 = vpop.f32.mrf.mxu0
      %v661 = vadd.f32 %v547, %v660
      %662 = vdwg.mxu0
      %vm663 = vcmask 130048
      %664 = vst.msk [vmem:[%s280] sm:$0xff] %vm663, %v616
      %665 = vst.msk [vmem:[%s280 + $0x8] sm:$0xff] %vm663, %v619
      %666 = vst.msk [vmem:[%s280 + $0x10] sm:$0xff] %vm663, %v622
      %667 = vst.msk [vmem:[%s280 + $0x18] sm:$0xff] %vm663, %v625
      %668 = vst.msk [vmem:[%s280 + $0x20] sm:$0xff] %vm663, %v628
      %669 = vst.msk [vmem:[%s280 + $0x28] sm:$0xff] %vm663, %v631
      %670 = vst.msk [vmem:[%s280 + $0x30] sm:$0xff] %vm663, %v634
      %671 = vst.msk [vmem:[%s280 + $0x38] sm:$0xff] %vm663, %v637
      %672 = vst.msk [vmem:[%s280 + $0x40] sm:$0xff] %vm663, %v640
      %673 = vst.msk [vmem:[%s280 + $0x48] sm:$0xff] %vm663, %v643
      %674 = vst.msk [vmem:[%s280 + $0x50] sm:$0xff] %vm663, %v646
      %675 = vst.msk [vmem:[%s280 + $0x58] sm:$0xff] %vm663, %v649
      %676 = vst.msk [vmem:[%s280 + $0x60] sm:$0xff] %vm663, %v652
      %677 = vst.msk [vmem:[%s280 + $0x68] sm:$0xff] %vm663, %v655
      %678 = vst.msk [vmem:[%s280 + $0x70] sm:$0xff] %vm663, %v658
      %679 = vst.msk [vmem:[%s280 + $0x78] sm:$0xff] %vm663, %v661
      %s680 = smul.u32 16, %s18
      %p681 = scmp.lt.s32.totalorder %s680, 31
      %s682 = scalar_select %p681, %s680, 31
      %s683 = smul.addr %s682, 8
      %s684 = scalar_lea.vmem %s7, %s683
      // Predicated region
      $region49: #{tpu_custom_call.1} parent=47 // pred_check
        %p685 = pneg %p188
      $region50: #{tpu_custom_call.1} parent=47 // pred_check_branch
        %687 = sbr.rel (%p685) target = $region52
      $region51: #{tpu_custom_call.1} parent=47 // pred_region
        %s688 = smul.u32 16, %s18
      $region52: #{tpu_custom_call.1} parent=47 // pred_fallthru
        _
    $region48: #{tpu_custom_call.1} parent=5 // pred_fallthru
      _
    %p689 = scmp.le.s32.totalorder 2, %s13
    // Predicated region
    $region53: #{tpu_custom_call.1} parent=5 // pred_check
      %p690 = pneg %p689
    $region54: #{tpu_custom_call.1} parent=5 // pred_check_branch
      %692 = sbr.rel (%p690) target = $region56
    $region55: #{tpu_custom_call.1} parent=5 // pred_region
      %s693 = ssub.s32 %s13, 2
      // Predicated region
      $region57: #{tpu_custom_call.1} parent=55 // pred_check
        %p694 = pneg %p194
      $region58: #{tpu_custom_call.1} parent=55 // pred_check_branch
        %696 = sbr.rel (%p694) target = $region60
      $region59: #{tpu_custom_call.1} parent=55 // pred_region
        %s697 = smul.u32 16, %s19
        %p698 = scmp.lt.s32.totalorder %s697, 31
        %s699 = scalar_select %p698, %s697, 31
        %s700 = smul.addr %s699, 8
        %s701 = scalar_lea.vmem %s7, %s700
      $region60: #{tpu_custom_call.1} parent=55 // pred_fallthru
        _
    $region56: #{tpu_custom_call.1} parent=5 // pred_fallthru
      _
  $region6: #{tpu_custom_call.1} parent=0 // loop_footer
    %s17 = sadd.s32 1, %s13
  $region7: #{tpu_custom_call.1} parent=0 // loop_footer_branch
    %12 = sbr.rel target = $region3
  $region8: #{tpu_custom_call.1} parent=0 // loop_exit
    _

</llo_original>
